<compile_context>
chip_gen: v6e
topology: v6e:2x2x1
jax: 0.10.0
libtpu: 0.0.40
codegen_flags: <defaults>
</compile_context>

<pallas_src>
import jax
import jax.numpy as jnp
from jax.experimental import pallas as pl
from jax.experimental.pallas import tpu as pltpu


# Inputs smaller than this are returned directly even on the kernel path
# requestable via `force_kernel`; a memcpy launch costs more than doing nothing.
_PASSTHROUGH_MAX_BYTES = 1 << 20  # 1 MiB


def _identity_dma_kernel(x_hbm, o_hbm, sem):
    # Single full-array HBM -> HBM DMA. No VMEM staging, no grid loop; the DMA
    # engine streams the whole tensor at HBM bandwidth.
    cp = pltpu.make_async_copy(x_hbm, o_hbm, sem)
    cp.start()
    cp.wait()


def _pallas_identity_copy(x: jax.Array) -> jax.Array:
    """HBM->HBM DMA copy of `x` via a single Pallas call (no grid)."""
    return pl.pallas_call(
        _identity_dma_kernel,
        out_shape=jax.ShapeDtypeStruct(x.shape, x.dtype),
        in_specs=[pl.BlockSpec(memory_space=pl.ANY)],
        out_specs=pl.BlockSpec(memory_space=pl.ANY),
        scratch_shapes=[pltpu.SemaphoreType.DMA(())],
    )(x)


def rnn_identity(x: jax.Array, *, force_kernel: bool = False):
    """Pallas implementation of RNNIdentity.forward: returns (x, None).

    Default: pure pass-through (the identity needs no HBM traffic).
    force_kernel=True (or large inputs) routes through the Pallas DMA copy so
    the op can stand in as a pipeline placeholder.
    """
    nbytes = x.size * jnp.dtype(x.dtype).itemsize

    # 0-d inputs and the default path never launch a kernel.
    if x.ndim == 0:
        return x, None
    if not force_kernel and nbytes < _PASSTHROUGH_MAX_BYTES:
        return x, None

    return _pallas_identity_copy(x), None


if __name__ == "__main__":
    key = jax.random.PRNGKey(0)
    # Small sequencer-style input: (B, H, W, C)
    x = jax.random.normal(key, (2, 16, 16, 4), dtype=jnp.float32)

    # Exercise the Pallas HBM->HBM DMA path explicitly.
    y, state = rnn_identity(x, force_kernel=True)
    jax.block_until_ready(y)
    assert state is None
    assert y.shape == x.shape and y.dtype == x.dtype
    assert bool(jnp.all(y == x))

    # Recommended default path: no kernel, zero-cost pass-through.
    y2, state2 = rnn_identity(x)
    assert state2 is None
    assert y2 is x

    print("KERNEL_OK")
</pallas_src>

<mosaic_0001>
module attributes {stable_mosaic.version = 11 : i64} {
  func.func @_identity_dma_kernel(%arg0: memref<2x16x16x4xf32, #tpu.memory_space<any>>, %arg1: memref<2x16x16x4xf32, #tpu.memory_space<any>>, %arg2: memref<!tpu.dma_semaphore, #tpu.memory_space<semaphore_mem>>) attributes {dimension_semantics = [], scalar_prefetch = 0 : i64, scratch_operands = 1 : i64, tpu.core_type = #tpu.core_type<tc>} {
    tpu.enqueue_dma source(%arg0 : memref<2x16x16x4xf32, #tpu.memory_space<any>>) target(%arg1 : memref<2x16x16x4xf32, #tpu.memory_space<any>>) target_semaphore(%arg2 : memref<!tpu.dma_semaphore, #tpu.memory_space<semaphore_mem>>)
    tpu.wait_dma2 semaphore(%arg2 : memref<!tpu.dma_semaphore, #tpu.memory_space<semaphore_mem>>) src(%arg0 : memref<2x16x16x4xf32, #tpu.memory_space<any>>) dst(%arg1 : memref<2x16x16x4xf32, #tpu.memory_space<any>>)
    return
  }
}

</mosaic_0001>

<llo_original>
// kernel: tpu_custom_call.1
$region0: #{tpu_custom_call.1}
  #allocation0 [shape = 'u32[]', space=smem, size = 0x4, offset = 0x4, fixed_abs, tag = 'smem constant byte address 0x4 - core index']
  #allocation1 [shape = 'u32[144,128]{1,0:T(1,128)}', space=vmem, size = 0x12000, scoped, tag = 'internal scratch']
  #allocation2 [shape = 's32[1]{0}', space=sflag, size = 0x4, scoped, tag = 'scratch operand']
  #allocation3 [shape = 's32[]', space=sflag, size = 0x4, offset = 0, fixed_abs, tag = 'sflag constant byte address 0x0 - dummy sync flag']
  %s0 = inlined_call_operand.vmem [shape: f32[2,16,16,4], index: 0, kind: input, shape index: {}]
  %s1 = inlined_call_operand.vmem [shape: f32[2,16,16,4], index: 1, kind: output, shape index: {}]
  %s2 = sld [smem:[#allocation0]]
  $region36: #{tpu_custom_call.1} parent=0
    _
  %s4 = ssub.s32 1, %s2
  %s5 = scalar_select 0, %s4, %s2
  %p7 = scmp.lt.u32.totalorder 512, 8
  %p8 = pneg %p7
  // Predicated region
  $region2: #{tpu_custom_call.1} parent=0 // pred_check
    _
  $region3: #{tpu_custom_call.1} parent=0 // pred_check_branch
    %10 = sbr.rel (%p7) target = $region5
  $region4: #{tpu_custom_call.1} parent=0 // pred_region
    %s26 = sand.u32 512, 7
    %p27 = scmp.eq.s32.totalorder %s26, 0
    // Predicated region
    $region17: #{tpu_custom_call.1} parent=4 // pred_check
      %p28 = pneg %p27
    $region18: #{tpu_custom_call.1} parent=4 // pred_check_branch
      %30 = sbr.rel (%p28) target = $region20
    $region19: #{tpu_custom_call.1} parent=4 // pred_region
      loop: start=0, step=1, limit=1
      $region21: #{tpu_custom_call.1} parent=19 // loop_pre_header
        _
      $region22: #{tpu_custom_call.1} parent=19 // loop_header
        %s32 = sphi 0, %s36
        %p33 = scmp.ge.s32.totalorder %s32, 1
        %s37 = sphi %s0, %s0
        %s38 = sphi %s1, %s1
      $region23: #{tpu_custom_call.1} parent=19 // loop_header_branch
        %35 = sbr.rel (%p33) target = $region27
      $region24: #{tpu_custom_call.1} parent=19 // loop_body
        %v39 = vld [vmem:[%s37] sm:$0xff]
        %40 = vst [vmem:[%s38] sm:$0xff] %v39
        %v41 = vld [vmem:[%s37 + $0x8] sm:$0xff]
        %42 = vst [vmem:[%s38 + $0x8] sm:$0xff] %v41
        %v43 = vld [vmem:[%s37 + $0x10] sm:$0xff]
        %44 = vst [vmem:[%s38 + $0x10] sm:$0xff] %v43
        %v45 = vld [vmem:[%s37 + $0x18] sm:$0xff]
        %46 = vst [vmem:[%s38 + $0x18] sm:$0xff] %v45
        %v47 = vld [vmem:[%s37 + $0x20] sm:$0xff]
        %48 = vst [vmem:[%s38 + $0x20] sm:$0xff] %v47
        %v49 = vld [vmem:[%s37 + $0x28] sm:$0xff]
        %50 = vst [vmem:[%s38 + $0x28] sm:$0xff] %v49
        %v51 = vld [vmem:[%s37 + $0x30] sm:$0xff]
        %52 = vst [vmem:[%s38 + $0x30] sm:$0xff] %v51
        %v53 = vld [vmem:[%s37 + $0x38] sm:$0xff]
        %54 = vst [vmem:[%s38 + $0x38] sm:$0xff] %v53
        %v55 = vld [vmem:[%s37 + $0x40] sm:$0xff]
        %56 = vst [vmem:[%s38 + $0x40] sm:$0xff] %v55
        %v57 = vld [vmem:[%s37 + $0x48] sm:$0xff]
        %58 = vst [vmem:[%s38 + $0x48] sm:$0xff] %v57
        %v59 = vld [vmem:[%s37 + $0x50] sm:$0xff]
        %60 = vst [vmem:[%s38 + $0x50] sm:$0xff] %v59
        %v61 = vld [vmem:[%s37 + $0x58] sm:$0xff]
        %62 = vst [vmem:[%s38 + $0x58] sm:$0xff] %v61
        %v63 = vld [vmem:[%s37 + $0x60] sm:$0xff]
        %64 = vst [vmem:[%s38 + $0x60] sm:$0xff] %v63
        %v65 = vld [vmem:[%s37 + $0x68] sm:$0xff]
        %66 = vst [vmem:[%s38 + $0x68] sm:$0xff] %v65
        %v67 = vld [vmem:[%s37 + $0x70] sm:$0xff]
        %68 = vst [vmem:[%s38 + $0x70] sm:$0xff] %v67
        %v69 = vld [vmem:[%s37 + $0x78] sm:$0xff]
        %70 = vst [vmem:[%s38 + $0x78] sm:$0xff] %v69
        %v71 = vld [vmem:[%s37 + $0x80] sm:$0xff]
        %72 = vst [vmem:[%s38 + $0x80] sm:$0xff] %v71
        %v73 = vld [vmem:[%s37 + $0x88] sm:$0xff]
        %74 = vst [vmem:[%s38 + $0x88] sm:$0xff] %v73
        %v75 = vld [vmem:[%s37 + $0x90] sm:$0xff]
        %76 = vst [vmem:[%s38 + $0x90] sm:$0xff] %v75
        %v77 = vld [vmem:[%s37 + $0x98] sm:$0xff]
        %78 = vst [vmem:[%s38 + $0x98] sm:$0xff] %v77
        %v79 = vld [vmem:[%s37 + $0xa0] sm:$0xff]
        %80 = vst [vmem:[%s38 + $0xa0] sm:$0xff] %v79
        %v81 = vld [vmem:[%s37 + $0xa8] sm:$0xff]
        %82 = vst [vmem:[%s38 + $0xa8] sm:$0xff] %v81
        %v83 = vld [vmem:[%s37 + $0xb0] sm:$0xff]
        %84 = vst [vmem:[%s38 + $0xb0] sm:$0xff] %v83
        %v85 = vld [vmem:[%s37 + $0xb8] sm:$0xff]
        %86 = vst [vmem:[%s38 + $0xb8] sm:$0xff] %v85
        %v87 = vld [vmem:[%s37 + $0xc0] sm:$0xff]
        %88 = vst [vmem:[%s38 + $0xc0] sm:$0xff] %v87
        %v89 = vld [vmem:[%s37 + $0xc8] sm:$0xff]
        %90 = vst [vmem:[%s38 + $0xc8] sm:$0xff] %v89
        %v91 = vld [vmem:[%s37 + $0xd0] sm:$0xff]
        %92 = vst [vmem:[%s38 + $0xd0] sm:$0xff] %v91
        %v93 = vld [vmem:[%s37 + $0xd8] sm:$0xff]
        %94 = vst [vmem:[%s38 + $0xd8] sm:$0xff] %v93
        %v95 = vld [vmem:[%s37 + $0xe0] sm:$0xff]
        %96 = vst [vmem:[%s38 + $0xe0] sm:$0xff] %v95
        %v97 = vld [vmem:[%s37 + $0xe8] sm:$0xff]
        %98 = vst [vmem:[%s38 + $0xe8] sm:$0xff] %v97
        %v99 = vld [vmem:[%s37 + $0xf0] sm:$0xff]
        %100 = vst [vmem:[%s38 + $0xf0] sm:$0xff] %v99
        %v101 = vld [vmem:[%s37 + $0xf8] sm:$0xff]
        %102 = vst [vmem:[%s38 + $0xf8] sm:$0xff] %v101
        %v103 = vld [vmem:[%s37 + $0x100] sm:$0xff]
        %104 = vst [vmem:[%s38 + $0x100] sm:$0xff] %v103
        %v105 = vld [vmem:[%s37 + $0x108] sm:$0xff]
        %106 = vst [vmem:[%s38 + $0x108] sm:$0xff] %v105
        %v107 = vld [vmem:[%s37 + $0x110] sm:$0xff]
        %108 = vst [vmem:[%s38 + $0x110] sm:$0xff] %v107
        %v109 = vld [vmem:[%s37 + $0x118] sm:$0xff]
        %110 = vst [vmem:[%s38 + $0x118] sm:$0xff] %v109
        %v111 = vld [vmem:[%s37 + $0x120] sm:$0xff]
        %112 = vst [vmem:[%s38 + $0x120] sm:$0xff] %v111
        %v113 = vld [vmem:[%s37 + $0x128] sm:$0xff]
        %114 = vst [vmem:[%s38 + $0x128] sm:$0xff] %v113
        %v115 = vld [vmem:[%s37 + $0x130] sm:$0xff]
        %116 = vst [vmem:[%s38 + $0x130] sm:$0xff] %v115
        %v117 = vld [vmem:[%s37 + $0x138] sm:$0xff]
        %118 = vst [vmem:[%s38 + $0x138] sm:$0xff] %v117
        %v119 = vld [vmem:[%s37 + $0x140] sm:$0xff]
        %120 = vst [vmem:[%s38 + $0x140] sm:$0xff] %v119
        %v121 = vld [vmem:[%s37 + $0x148] sm:$0xff]
        %122 = vst [vmem:[%s38 + $0x148] sm:$0xff] %v121
        %v123 = vld [vmem:[%s37 + $0x150] sm:$0xff]
        %124 = vst [vmem:[%s38 + $0x150] sm:$0xff] %v123
        %v125 = vld [vmem:[%s37 + $0x158] sm:$0xff]
        %126 = vst [vmem:[%s38 + $0x158] sm:$0xff] %v125
        %v127 = vld [vmem:[%s37 + $0x160] sm:$0xff]
        %128 = vst [vmem:[%s38 + $0x160] sm:$0xff] %v127
        %v129 = vld [vmem:[%s37 + $0x168] sm:$0xff]
        %130 = vst [vmem:[%s38 + $0x168] sm:$0xff] %v129
        %v131 = vld [vmem:[%s37 + $0x170] sm:$0xff]
        %132 = vst [vmem:[%s38 + $0x170] sm:$0xff] %v131
        %v133 = vld [vmem:[%s37 + $0x178] sm:$0xff]
        %134 = vst [vmem:[%s38 + $0x178] sm:$0xff] %v133
        %v135 = vld [vmem:[%s37 + $0x180] sm:$0xff]
        %136 = vst [vmem:[%s38 + $0x180] sm:$0xff] %v135
        %v137 = vld [vmem:[%s37 + $0x188] sm:$0xff]
        %138 = vst [vmem:[%s38 + $0x188] sm:$0xff] %v137
        %v139 = vld [vmem:[%s37 + $0x190] sm:$0xff]
        %140 = vst [vmem:[%s38 + $0x190] sm:$0xff] %v139
        %v141 = vld [vmem:[%s37 + $0x198] sm:$0xff]
        %142 = vst [vmem:[%s38 + $0x198] sm:$0xff] %v141
        %v143 = vld [vmem:[%s37 + $0x1a0] sm:$0xff]
        %144 = vst [vmem:[%s38 + $0x1a0] sm:$0xff] %v143
        %v145 = vld [vmem:[%s37 + $0x1a8] sm:$0xff]
        %146 = vst [vmem:[%s38 + $0x1a8] sm:$0xff] %v145
        %v147 = vld [vmem:[%s37 + $0x1b0] sm:$0xff]
        %148 = vst [vmem:[%s38 + $0x1b0] sm:$0xff] %v147
        %v149 = vld [vmem:[%s37 + $0x1b8] sm:$0xff]
        %150 = vst [vmem:[%s38 + $0x1b8] sm:$0xff] %v149
        %v151 = vld [vmem:[%s37 + $0x1c0] sm:$0xff]
        %152 = vst [vmem:[%s38 + $0x1c0] sm:$0xff] %v151
        %v153 = vld [vmem:[%s37 + $0x1c8] sm:$0xff]
        %154 = vst [vmem:[%s38 + $0x1c8] sm:$0xff] %v153
        %v155 = vld [vmem:[%s37 + $0x1d0] sm:$0xff]
        %156 = vst [vmem:[%s38 + $0x1d0] sm:$0xff] %v155
        %v157 = vld [vmem:[%s37 + $0x1d8] sm:$0xff]
        %158 = vst [vmem:[%s38 + $0x1d8] sm:$0xff] %v157
        %v159 = vld [vmem:[%s37 + $0x1e0] sm:$0xff]
        %160 = vst [vmem:[%s38 + $0x1e0] sm:$0xff] %v159
        %v161 = vld [vmem:[%s37 + $0x1e8] sm:$0xff]
        %162 = vst [vmem:[%s38 + $0x1e8] sm:$0xff] %v161
        %v163 = vld [vmem:[%s37 + $0x1f0] sm:$0xff]
        %164 = vst [vmem:[%s38 + $0x1f0] sm:$0xff] %v163
        %v165 = vld [vmem:[%s37 + $0x1f8] sm:$0xff]
        %166 = vst [vmem:[%s38 + $0x1f8] sm:$0xff] %v165
      $region25: #{tpu_custom_call.1} parent=19 // loop_footer
        %s36 = sadd.s32 1, %s32
      $region26: #{tpu_custom_call.1} parent=19 // loop_footer_branch
        %31 = sbr.rel target = $region22
      $region27: #{tpu_custom_call.1} parent=19 // loop_exit
        _
    $region20: #{tpu_custom_call.1} parent=4 // pred_fallthru
      _
    %p167 = pneg %p27
    // Predicated region
    $region28: #{tpu_custom_call.1} parent=4 // pred_check
      _
    $region29: #{tpu_custom_call.1} parent=4 // pred_check_branch
      %169 = sbr.rel (%p27) target = $region31
    $region30: #{tpu_custom_call.1} parent=4 // pred_region
      %s170 = sand.u32 512, 7
    $region31: #{tpu_custom_call.1} parent=4 // pred_fallthru
      _
  $region5: #{tpu_custom_call.1} parent=0 // pred_fallthru
    _
  // Predicated region
  $region6: #{tpu_custom_call.1} parent=0 // pred_check
    %p11 = pneg %p7
  $region7: #{tpu_custom_call.1} parent=0 // pred_check_branch
    %13 = sbr.rel (%p11) target = $region9
  $region8: #{tpu_custom_call.1} parent=0 // pred_region
    %s14 = sshll.u32 1, 512
    %s15 = ssub.s32 %s14, 1
    loop: start=0, step=1, limit=1
    $region10: #{tpu_custom_call.1} parent=8 // loop_pre_header
      _
    $region11: #{tpu_custom_call.1} parent=8 // loop_header
      %s17 = sphi 0, %s21
      %p18 = scmp.ge.s32.totalorder %s17, 1
      %s22 = sphi %s0, %s0
      %s23 = sphi %s1, %s1
    $region12: #{tpu_custom_call.1} parent=8 // loop_header_branch
      %20 = sbr.rel (%p18) target = $region16
    $region13: #{tpu_custom_call.1} parent=8 // loop_body
      %v24 = vld [vmem:[%s22] sm:%s15]
      %25 = vst [vmem:[%s23] sm:%s15] %v24
    $region14: #{tpu_custom_call.1} parent=8 // loop_footer
      %s21 = sadd.s32 1, %s17
    $region15: #{tpu_custom_call.1} parent=8 // loop_footer_branch
      %16 = sbr.rel target = $region11
    $region16: #{tpu_custom_call.1} parent=8 // loop_exit
      _
  $region9: #{tpu_custom_call.1} parent=0 // pred_fallthru
    _
  // Predicated region
  $region32: #{tpu_custom_call.1} parent=0 // pred_check
    _
  $region33: #{tpu_custom_call.1} parent=0 // pred_check_branch
    %173 = sbr.rel (0) target = $region35
  $region34: #{tpu_custom_call.1} parent=0 // pred_region
    %174 = vsyncadd [#allocation2], 8192
  $region35: #{tpu_custom_call.1} parent=0 // pred_fallthru
    _
  %s175 = smul.u32 2, 16
  %s176 = smul.u32 %s175, 16
  %s177 = smul.u32 %s176, 1
  %s178 = sshll.u32 %s177, 4
  %179 = dma.done [#allocation2], %s178
  %180 = vsyncmov [#allocation2]
  %s181 = vpop.sfrf %180
  %p182 = scmp.eq.s32.totalorder %s181, 0
  %p183 = pneg %p182
  %185 = shalt.err (%p183)

</llo_original>
